<compile_context>
chip_gen: v7x
topology: tpu7x:2x2x1
jax: 0.10.0
libtpu: 0.0.40
codegen_flags: <defaults>
</compile_context>

<pallas_src>
import jax
import jax.numpy as jnp
from jax import lax
from jax.experimental import pallas as pl
from jax.experimental.pallas import tpu as pltpu


def _spectral_mix_kernel(x_ref, w_ref, o_ref):
    # x: (TM, B, 2*Ci) bf16   w: (TM, 2*Ci, 2*Co) bf16   o: (TM, B, 2*Co) f32
    # Batched-over-modes matmul; the 2*Ci contraction runs on the MXU with
    # f32 accumulation.
    o_ref[...] = lax.dot_general(
        x_ref[...],
        w_ref[...],
        dimension_numbers=(((2,), (1,)), ((0,), (0,))),
        preferred_element_type=jnp.float32,
    )


def _pick_mode_tile(n_modes, per_mode_bytes, *, byte_cap=6 << 20, target_steps=4):
    """Largest divisor of n_modes whose per-step block bytes fit `byte_cap`
    while keeping >= target_steps grid steps (>= 2 so v7x's two TensorCores
    both get work and the DMA pipeline can overlap); degrades gracefully.
    Picking a divisor means no mode-axis padding is ever required.
    (On v5e a smaller cap would also be fine — step overhead is only ~12% of a
    2 MiB step there — but 6 MiB is harmless and helps v6e/v7x.)"""
    divisors = [d for d in range(1, n_modes + 1) if n_modes % d == 0]
    fitting = [d for d in divisors if d * per_mode_bytes <= byte_cap] or [1]
    for steps in (min(target_steps, n_modes), 2, 1):
        ok = [d for d in fitting if n_modes // d >= steps]
        if ok:
            return max(ok)
    return 1


def spectral_channel_mix(xp, wp):
    """xp: (Mtot, B, 2*Ci), wp: (Mtot, 2*Ci, 2*Co) -> (Mtot, B, 2*Co) f32."""
    mtot, b, two_ci = xp.shape
    two_co = wp.shape[2]
    per_mode_bytes = (b * two_ci * xp.dtype.itemsize
                      + two_ci * two_co * wp.dtype.itemsize
                      + b * two_co * 4)
    tm = _pick_mode_tile(mtot, per_mode_bytes)
    grid = (mtot // tm,)
    flops = 2 * mtot * b * two_ci * two_co
    bytes_accessed = (xp.size * xp.dtype.itemsize
                      + wp.size * wp.dtype.itemsize
                      + mtot * b * two_co * 4)
    return pl.pallas_call(
        _spectral_mix_kernel,
        out_shape=jax.ShapeDtypeStruct((mtot, b, two_co), jnp.float32),
        grid_spec=pltpu.PrefetchScalarGridSpec(
            num_scalar_prefetch=0,
            grid=grid,
            in_specs=[
                pl.BlockSpec((tm, b, two_ci), lambda m: (m, 0, 0)),
                pl.BlockSpec((tm, two_ci, two_co), lambda m: (m, 0, 0)),
            ],
            out_specs=pl.BlockSpec((tm, b, two_co), lambda m: (m, 0, 0)),
        ),
        compiler_params=pltpu.CompilerParams(
            dimension_semantics=("parallel",),
            # Explicit limit: v5e scoped default is only 16 MiB; 32 MiB keeps
            # double-buffered 6 MiB steps comfortable even on v7x (64 MiB phys).
            vmem_limit_bytes=32 * 1024 * 1024,
        ),
        cost_estimate=pl.CostEstimate(
            flops=flops, transcendentals=0, bytes_accessed=bytes_accessed),
    )(xp, wp)


def _pack_weights(w1r, w1i, w2r, w2i):
    """Pack complex (Ci,Co,m1,m2) weights (two corners) into the real per-mode
    block [[wr, wi], [-wi, wr]]: returns (2*M, 2*Ci, 2*Co) with M = m1*m2."""
    Ci, Co, m1, m2 = w1r.shape
    M = m1 * m2
    wr = jnp.concatenate([w1r.reshape(Ci, Co, M),
                          w2r.reshape(Ci, Co, M)], axis=-1)     # (Ci, Co, 2M)
    wi = jnp.concatenate([w1i.reshape(Ci, Co, M),
                          w2i.reshape(Ci, Co, M)], axis=-1)     # (Ci, Co, 2M)
    wfull = jnp.concatenate(
        [jnp.concatenate([wr, wi], axis=1),
         jnp.concatenate([-wi, wr], axis=1)],
        axis=0)                                                 # (2Ci, 2Co, 2M)
    return jnp.transpose(wfull, (2, 0, 1))                      # (2M, 2Ci, 2Co)


class SpectralConv2d:
    def __init__(self, in_channels, out_channels, modes1, modes2, key,
                 compute_dtype=jnp.bfloat16):
        self.in_channels = in_channels
        self.out_channels = out_channels
        self.modes1 = modes1
        self.modes2 = modes2
        self.scale = 1.0 / (in_channels * out_channels)
        self.compute_dtype = compute_dtype
        k1, k2, k3, k4 = jax.random.split(key, 4)
        shape = (in_channels, out_channels, modes1, modes2)
        # torch.rand(..., dtype=cfloat): real & imag both uniform in [0, 1)
        self.w1r = (self.scale * jax.random.uniform(k1, shape)).astype(jnp.float32)
        self.w1i = (self.scale * jax.random.uniform(k2, shape)).astype(jnp.float32)
        self.w2r = (self.scale * jax.random.uniform(k3, shape)).astype(jnp.float32)
        self.w2i = (self.scale * jax.random.uniform(k4, shape)).astype(jnp.float32)
        # Packed weights cached ONCE (avoids per-call concat/transpose HBM
        # passes); stored in bf16 to halve the dominant weight stream.
        self.wp = _pack_weights(self.w1r, self.w1i, self.w2r, self.w2i).astype(
            compute_dtype)                                      # (2M, 2Ci, 2Co)

    def __call__(self, x):
        B, Ci, H, W = x.shape
        assert Ci == self.in_channels
        Co = self.out_channels
        m1, m2 = self.modes1, self.modes2
        Wf = W // 2 + 1
        M = m1 * m2
        Mtot = 2 * M  # both retained spectral corners, flattened
        cdt = self.compute_dtype

        # TODO(synk): rfft2 / irfft2 have no Pallas equivalent; computed with XLA.
        x_ft = jnp.fft.rfft2(x)                                  # (B,Ci,H,Wf) c64

        # Single producer pass: gather both corners, put the mode axis major,
        # split real/imag along the contraction axis -> (2M, B, 2Ci).
        corners = jnp.concatenate([x_ft[:, :, :m1, :m2],
                                   x_ft[:, :, H - m1:, :m2]], axis=2)  # (B,Ci,2m1,m2)
        xc = jnp.transpose(corners, (2, 3, 0, 1)).reshape(Mtot, B, Ci)
        xp = jnp.concatenate([jnp.real(xc), jnp.imag(xc)], axis=-1).astype(cdt)

        # Hot path: per-mode channel mixing on the MXU inside Pallas.
        out = spectral_channel_mix(xp, self.wp)                  # (2M, B, 2Co) f32

        # Unpack [real | imag] columns and scatter back into the spectrum.
        out_c = (out[:, :, :Co] + 1j * out[:, :, Co:]).astype(jnp.complex64)
        out_c = jnp.transpose(out_c.reshape(2, m1, m2, B, Co),
                              (0, 3, 4, 1, 2))                   # (2,B,Co,m1,m2)

        out_ft = jnp.zeros((B, Co, H, Wf), dtype=jnp.complex64)
        out_ft = out_ft.at[:, :, :m1, :m2].set(out_c[0])
        out_ft = out_ft.at[:, :, H - m1:, :m2].set(out_c[1])

        return jnp.fft.irfft2(out_ft, s=(H, W)).astype(jnp.float32)


if __name__ == "__main__":
    key = jax.random.PRNGKey(0)
    k_x, k_w = jax.random.split(key)

    B, Ci, Co, H, W = 2, 4, 4, 16, 16
    modes1, modes2 = 4, 4

    x = jax.random.normal(k_x, (B, Ci, H, W), dtype=jnp.float32)

    layer = SpectralConv2d(Ci, Co, modes1, modes2, k_w)
    y = jax.block_until_ready(layer(x))
    assert y.shape == (B, Co, H, W) and y.dtype == jnp.float32

    # Pure-JAX reference for the original (torch) semantics.
    def complex_mix_reference(x_ft, w1, w2):
        out_ft = jnp.zeros((B, Co, H, W // 2 + 1), dtype=jnp.complex64)
        out_ft = out_ft.at[:, :, :modes1, :modes2].set(
            jnp.einsum('bixy,ioxy->boxy', x_ft[:, :, :modes1, :modes2], w1))
        out_ft = out_ft.at[:, :, H - modes1:, :modes2].set(
            jnp.einsum('bixy,ioxy->boxy', x_ft[:, :, H - modes1:, :modes2], w2))
        return jnp.fft.irfft2(out_ft, s=(H, W))

    x_ft = jnp.fft.rfft2(x)

    # (1) Kernel-mapping check at matched precision: same bf16-rounded operands,
    #     f32 accumulation -> should agree essentially exactly.
    q = lambda a: a.astype(jnp.bfloat16).astype(jnp.float32)
    x_ft_q = (q(jnp.real(x_ft)) + 1j * q(jnp.imag(x_ft))).astype(jnp.complex64)
    w1_q = (q(layer.w1r) + 1j * q(layer.w1i)).astype(jnp.complex64)
    w2_q = (q(layer.w2r) + 1j * q(layer.w2i)).astype(jnp.complex64)
    y_ref_q = complex_mix_reference(x_ft_q, w1_q, w2_q)
    assert jnp.allclose(y, y_ref_q, atol=1e-4, rtol=1e-4), (
        float(jnp.max(jnp.abs(y - y_ref_q))))

    # (2) End-to-end check against the full f32 reference; tolerance sized for
    #     bf16 operand quantization (f32 accumulation keeps it well inside).
    w1 = (layer.w1r + 1j * layer.w1i).astype(jnp.complex64)
    w2 = (layer.w2r + 1j * layer.w2i).astype(jnp.complex64)
    y_ref = complex_mix_reference(x_ft, w1, w2)
    assert jnp.allclose(y, y_ref, atol=5e-3, rtol=5e-3), (
        float(jnp.max(jnp.abs(y - y_ref))))

    print("KERNEL_OK")
</pallas_src>

<mosaic_0001>
module attributes {stable_mosaic.version = 11 : i64} {
  func.func @_spectral_mix_kernel(%arg0: i32, %arg1: memref<8x2x8xbf16, #tpu.memory_space<vmem>>, %arg2: memref<8x8x8xbf16, #tpu.memory_space<vmem>>, %arg3: memref<8x2x8xf32, #tpu.memory_space<vmem>>) attributes {dimension_semantics = [#tpu.dimension_semantics<parallel>], iteration_bounds = array<i64: 4>, scalar_prefetch = 0 : i64, scratch_operands = 0 : i64, tpu.core_type = #tpu.core_type<tc>, window_params = [{transform_indices = @transform_0, window_bounds = array<i64: 8, 2, 8>}, {transform_indices = @transform_1, window_bounds = array<i64: 8, 8, 8>}, {transform_indices = @transform_2, window_bounds = array<i64: 8, 2, 8>}]} {
    %c0 = arith.constant 0 : index
    %c0_0 = arith.constant 0 : index
    %c0_1 = arith.constant 0 : index
    %0 = vector.load %arg1[%c0, %c0_0, %c0_1] : memref<8x2x8xbf16, #tpu.memory_space<vmem>>, vector<8x2x8xbf16>
    %c0_2 = arith.constant 0 : index
    %c0_3 = arith.constant 0 : index
    %c0_4 = arith.constant 0 : index
    %1 = vector.load %arg2[%c0_2, %c0_3, %c0_4] : memref<8x8x8xbf16, #tpu.memory_space<vmem>>, vector<8x8x8xbf16>
    %cst = arith.constant dense<0.000000e+00> : vector<8x2x8xf32>
    %2 = tpu.matmul %0, %1, %cst {dimension_numbers = #tpu.dot_dimension_numbers<[2], [1], [1], [2], [0, 0, 0, 1, 1, 2], [0], [0]>} : vector<8x2x8xbf16>, vector<8x8x8xbf16>, vector<8x2x8xf32> -> vector<8x2x8xf32>
    %c0_5 = arith.constant 0 : index
    %c0_6 = arith.constant 0 : index
    %c0_7 = arith.constant 0 : index
    %3 = vector.load %arg3[%c0_5, %c0_6, %c0_7] : memref<8x2x8xf32, #tpu.memory_space<vmem>>, vector<8x2x8xf32>
    tpu.vector_store %arg3[%c0_5, %c0_6, %c0_7], %2 {strides = array<i32>} : memref<8x2x8xf32, #tpu.memory_space<vmem>>, vector<8x2x8xf32>,
    return
  }
  func.func @transform_0(%arg0: i32) -> (i32, i32, i32) {
    %c0_i32 = arith.constant 0 : i32
    %c0_i32_0 = arith.constant 0 : i32
    %c0_i32_1 = arith.constant 0 : i32
    return %arg0, %c0_i32, %c0_i32_0 : i32, i32, i32
  }
  func.func @transform_1(%arg0: i32) -> (i32, i32, i32) {
    %c0_i32 = arith.constant 0 : i32
    %c0_i32_0 = arith.constant 0 : i32
    %c0_i32_1 = arith.constant 0 : i32
    return %arg0, %c0_i32, %c0_i32_0 : i32, i32, i32
  }
  func.func @transform_2(%arg0: i32) -> (i32, i32, i32) {
    %c0_i32 = arith.constant 0 : i32
    %c0_i32_0 = arith.constant 0 : i32
    %c0_i32_1 = arith.constant 0 : i32
    return %arg0, %c0_i32, %c0_i32_0 : i32, i32, i32
  }
}

</mosaic_0001>

<llo_original>
// kernel: tpu_custom_call.1
$region0: #{tpu_custom_call.1}
  #allocation0 [shape = 'u32[]', space=smem, size = 0x4, offset = 0x4, fixed_abs, tag = 'smem constant byte address 0x4 - core index']
  #allocation1 [shape = 'u32[144,128]{1,0:T(1,128)}', space=vmem, size = 0x12000, scoped, tag = 'internal scratch']
  %s0 = inlined_call_operand.vmem [shape: bf16[32,2,8], index: 0, kind: input, shape index: {}]
  %s1 = inlined_call_operand.vmem [shape: bf16[32,8,8], index: 1, kind: input, shape index: {}]
  %s2 = inlined_call_operand.vmem [shape: f32[32,2,8], index: 2, kind: output, shape index: {}]
  %s3 = sld [smem:[#allocation0]]
  $region41: #{tpu_custom_call.1} parent=0
    _
  %s5 = ssub.s32 1, %s3
  %s6 = scalar_select 0, %s5, %s3
  loop: start=0, step=1, limit=6
  $region2: #{tpu_custom_call.1} parent=0 // loop_pre_header
    _
  $region3: #{tpu_custom_call.1} parent=0 // loop_header
    %s8 = sphi 0, %s12
    %p9 = scmp.ge.s32.totalorder %s8, 6
    %s18 = sphi 0, %s20
    %s21 = sphi 0, %s18
    %s22 = sphi 0, %s21
    %s38 = sphi 0, %s22
    %s44 = sphi 0, %s46
    %s47 = sphi 0, %s44
    %s48 = sphi 0, %s47
    %s64 = sphi 0, %s48
    %s70 = sphi 0, %s72
    %s73 = sphi 0, %s70
    %s74 = sphi 0, %s73
    %s90 = sphi 0, %s74
  $region4: #{tpu_custom_call.1} parent=0 // loop_header_branch
    %11 = sbr.rel (%p9) target = $region8
  $region5: #{tpu_custom_call.1} parent=0 // loop_body
    %s13 = ssub.s32 %s8, 1
    %s14 = ssub.s32 %s8, 2
    %s15 = sadd.s32 %s8, 1
    %s16 = ssub.s32 %s8, %s15
    %p17 = scmp.eq.s32.totalorder %s16, 0
    %s19 = sadd.s32 %s18, 1
    %s20 = scalar_select %p17, %s18, %s19
    %p23 = pneg %p17
    %p24 = scmp.eq.s32.totalorder %s8, 3
    %p25 = por %p23, %p24
    %p26 = scmp.ne.s32.totalorder %s18, %s21
    %p27 = scmp.eq.s32.totalorder %s8, 0
    %p28 = por %p26, %p27
    %p29 = scmp.ne.s32.totalorder %s18, %s21
    %p30 = scmp.eq.s32.totalorder %s13, 3
    %p31 = por %p29, %p30
    %p32 = scmp.ne.s32.totalorder %s21, %s22
    %p33 = scmp.eq.s32.totalorder %s13, 0
    %p34 = por %p32, %p33
    %p35 = scmp.ne.s32.totalorder %s21, %s22
    %p36 = scmp.eq.s32.totalorder %s14, 3
    %p37 = por %p35, %p36
    %p39 = scmp.ne.s32.totalorder %s22, %s38
    %p40 = scmp.eq.s32.totalorder %s14, 0
    %p41 = por %p39, %p40
    %s42 = ssub.s32 %s8, %s15
    %p43 = scmp.eq.s32.totalorder %s42, 0
    %s45 = sadd.s32 %s44, 1
    %s46 = scalar_select %p43, %s44, %s45
    %p49 = pneg %p43
    %p50 = scmp.eq.s32.totalorder %s8, 3
    %p51 = por %p49, %p50
    %p52 = scmp.ne.s32.totalorder %s44, %s47
    %p53 = scmp.eq.s32.totalorder %s8, 0
    %p54 = por %p52, %p53
    %p55 = scmp.ne.s32.totalorder %s44, %s47
    %p56 = scmp.eq.s32.totalorder %s13, 3
    %p57 = por %p55, %p56
    %p58 = scmp.ne.s32.totalorder %s47, %s48
    %p59 = scmp.eq.s32.totalorder %s13, 0
    %p60 = por %p58, %p59
    %p61 = scmp.ne.s32.totalorder %s47, %s48
    %p62 = scmp.eq.s32.totalorder %s14, 3
    %p63 = por %p61, %p62
    %p65 = scmp.ne.s32.totalorder %s48, %s64
    %p66 = scmp.eq.s32.totalorder %s14, 0
    %p67 = por %p65, %p66
    %s68 = ssub.s32 %s8, %s15
    %p69 = scmp.eq.s32.totalorder %s68, 0
    %s71 = sadd.s32 %s70, 1
    %s72 = scalar_select %p69, %s70, %s71
    %p75 = pneg %p69
    %p76 = scmp.eq.s32.totalorder %s8, 3
    %p77 = por %p75, %p76
    %p78 = scmp.ne.s32.totalorder %s70, %s73
    %p79 = scmp.eq.s32.totalorder %s8, 0
    %p80 = por %p78, %p79
    %p81 = scmp.ne.s32.totalorder %s70, %s73
    %p82 = scmp.eq.s32.totalorder %s13, 3
    %p83 = por %p81, %p82
    %p84 = scmp.ne.s32.totalorder %s73, %s74
    %p85 = scmp.eq.s32.totalorder %s13, 0
    %p86 = por %p84, %p85
    %p87 = scmp.ne.s32.totalorder %s73, %s74
    %p88 = scmp.eq.s32.totalorder %s14, 3
    %p89 = por %p87, %p88
    %p91 = scmp.ne.s32.totalorder %s74, %s90
    %p92 = scmp.eq.s32.totalorder %s14, 0
    %p93 = por %p91, %p92
    %p94 = scmp.le.s32.totalorder 1, %s8
    %p95 = scmp.lt.s32.totalorder %s8, 5
    %p96 = pnand %p94, %p95
    %p97 = pneg %p96
    // Predicated region
    $region9: #{tpu_custom_call.1} parent=5 // pred_check
      _
    $region10: #{tpu_custom_call.1} parent=5 // pred_check_branch
      %99 = sbr.rel (%p96) target = $region12
    $region11: #{tpu_custom_call.1} parent=5 // pred_region
      %s100 = ssub.s32 %s8, 1
    $region12: #{tpu_custom_call.1} parent=5 // pred_fallthru
      _
    %p101 = scmp.lt.s32.totalorder %s8, 4
    // Predicated region
    $region13: #{tpu_custom_call.1} parent=5 // pred_check
      %p102 = pneg %p101
    $region14: #{tpu_custom_call.1} parent=5 // pred_check_branch
      %104 = sbr.rel (%p102) target = $region16
    $region15: #{tpu_custom_call.1} parent=5 // pred_region
      // Predicated region
      $region17: #{tpu_custom_call.1} parent=15 // pred_check
        %p105 = pneg %p28
      $region18: #{tpu_custom_call.1} parent=15 // pred_check_branch
        %107 = sbr.rel (%p105) target = $region20
      $region19: #{tpu_custom_call.1} parent=15 // pred_region
        %s108 = smul.u32 8, %s8
        %p109 = scmp.lt.s32.totalorder %s108, 31
        %s110 = scalar_select %p109, %s108, 31
        %s111 = scalar_lea.vmem %s0, %s110
        %s112 = smul.u32 8, %s8
      $region20: #{tpu_custom_call.1} parent=15 // pred_fallthru
        _
      // Predicated region
      $region21: #{tpu_custom_call.1} parent=15 // pred_check
        %p113 = pneg %p54
      $region22: #{tpu_custom_call.1} parent=15 // pred_check_branch
        %115 = sbr.rel (%p113) target = $region24
      $region23: #{tpu_custom_call.1} parent=15 // pred_region
        %s116 = smul.u32 8, %s8
        %p117 = scmp.lt.s32.totalorder %s116, 31
        %s118 = scalar_select %p117, %s116, 31
        %s119 = smul.addr %s118, 4
        %s120 = scalar_lea.vmem %s1, %s119
        %s121 = smul.u32 8, %s8
      $region24: #{tpu_custom_call.1} parent=15 // pred_fallthru
        _
    $region16: #{tpu_custom_call.1} parent=5 // pred_fallthru
      _
    %p122 = scmp.le.s32.totalorder 1, %s8
    %p123 = scmp.lt.s32.totalorder %s8, 5
    %p124 = pnand %p122, %p123
    %p125 = pneg %p124
    // Predicated region
    $region25: #{tpu_custom_call.1} parent=5 // pred_check
      _
    $region26: #{tpu_custom_call.1} parent=5 // pred_check_branch
      %127 = sbr.rel (%p124) target = $region28
    $region27: #{tpu_custom_call.1} parent=5 // pred_region
      %s128 = ssub.s32 %s8, 1
      %s129 = smul.u32 8, %s13
      %p130 = scmp.lt.s32.totalorder %s129, 31
      %s131 = scalar_select %p130, %s129, 31
      %s132 = scalar_lea.vmem %s0, %s131
      %p133 = pneg %p34
      %p134 = pneg %p31
      %s135 = smul.u32 8, %s13
      %p136 = scmp.lt.s32.totalorder %s135, 31
      %s137 = scalar_select %p136, %s135, 31
      %s138 = smul.addr %s137, 4
      %s139 = scalar_lea.vmem %s1, %s138
      %p140 = pneg %p60
      %p141 = pneg %p57
      %p142 = pneg %p86
      %p143 = pneg %p83
      %s144 = smul.u32 8, %s13
      %p145 = scmp.lt.s32.totalorder %s144, 31
      %s146 = scalar_select %p145, %s144, 31
      %s147 = smul.addr %s146, 2
      %s148 = scalar_lea.vmem %s2, %s147
      %s149 = smul.u32 8, %s13
      %p150 = scmp.lt.s32.totalorder %s149, 31
      %s151 = scalar_select %p150, %s149, 31
      %s152 = scalar_lea.vmem %s0, %s151
      %s153 = smul.u32 8, %s13
      %s154 = smul.u32 8, %s13
      %p155 = scmp.lt.s32.totalorder %s154, 31
      %s156 = scalar_select %p155, %s154, 31
      %s157 = smul.addr %s156, 4
      %s158 = scalar_lea.vmem %s1, %s157
      %s159 = smul.u32 8, %s13
      %s160 = smul.u32 8, %s13
      %p161 = scmp.lt.s32.totalorder %s160, 31
      %s162 = scalar_select %p161, %s160, 31
      %s163 = smul.addr %s162, 2
      %s164 = scalar_lea.vmem %s2, %s163
      %s165 = smul.u32 8, %s13
      %v167 = vld [vmem:[%s152] sm:$0x1]
      %v168 = vld [vmem:[%s152 + $0x1] sm:$0x1]
      %v169 = vld [vmem:[%s152 + $0x2] sm:$0x1]
      %v170 = vld [vmem:[%s152 + $0x3] sm:$0x1]
      %v171 = vld [vmem:[%s152 + $0x4] sm:$0x1]
      %v172 = vld [vmem:[%s152 + $0x5] sm:$0x1]
      %v173 = vld [vmem:[%s152 + $0x6] sm:$0x1]
      %v174 = vld [vmem:[%s152 + $0x7] sm:$0x1]
      %v175 = vld [vmem:[%s158] sm:$0xf]
      %v176 = vld [vmem:[%s158 + $0x4] sm:$0xf]
      %v177 = vld [vmem:[%s158 + $0x8] sm:$0xf]
      %v178 = vld [vmem:[%s158 + $0xc] sm:$0xf]
      %v179 = vld [vmem:[%s158 + $0x10] sm:$0xf]
      %v180 = vld [vmem:[%s158 + $0x14] sm:$0xf]
      %v181 = vld [vmem:[%s158 + $0x18] sm:$0xf]
      %v182 = vld [vmem:[%s158 + $0x1c] sm:$0xf]
      %vm183 = vcmask 64512
      %v185 = vsel %vm183, %v167, 0
      %vm187 = vcmask 1043456
      %v189 = vsel %vm187, %v175, 0
      %191 = vmatprep.subr.bf16.mxu0 0
      %192 = vmatpush1.bf16.msra.mxu0 %v189
      %193 = vmatprep.subr.bf16.mxu0 0
      %194 = vmatpush1.bf16.msra.mxu0 0
      %195 = vmatprep.subr.bf16.mxu0 0
      %196 = vmatpush1.bf16.msra.mxu0 0
      %197 = vmatprep.subr.bf16.mxu0 0
      %198 = vmatpush1.bf16.msra.mxu0 0
      %199 = vmatprep.subr.bf16.mxu0 0
      %200 = vmatpush1.bf16.msra.mxu0 0
      %201 = vmatprep.subr.bf16.mxu0 0
      %202 = vmatpush1.bf16.msra.mxu0 0
      %203 = vmatprep.subr.bf16.mxu0 0
      %204 = vmatpush1.bf16.msra.mxu0 0
      %205 = vmatprep.subr.bf16.mxu0 0
      %206 = vmatpush1.bf16.msra.mxu0 0
      %207 = vmatprep.subr.bf16.mxu0 0
      %208 = vmatpush1.bf16.msra.mxu0 0
      %209 = vmatprep.subr.bf16.mxu0 0
      %210 = vmatpush1.bf16.msra.mxu0 0
      %211 = vmatprep.subr.bf16.mxu0 0
      %212 = vmatpush1.bf16.msra.mxu0 0
      %213 = vmatprep.subr.bf16.mxu0 0
      %214 = vmatpush1.bf16.msra.mxu0 0
      %215 = vmatprep.subr.bf16.mxu0 0
      %216 = vmatpush1.bf16.msra.mxu0 0
      %217 = vmatprep.subr.bf16.mxu0 0
      %218 = vmatpush1.bf16.msra.mxu0 0
      %219 = vmatprep.subr.bf16.mxu0 0
      %220 = vmatpush1.bf16.msra.mxu0 0
      %221 = vmatprep.subr.bf16.mxu0 0
      %222 = vmatpush1.bf16.msra.mxu0 0
      %223 = vmatprep.mubr.bf16.mxu0 0
      %224 = vmatmul.mubr.bf16.gmra.mrb[0].mxu0 %v185
      %v225 = vpop.f32.mrb[0].mxu0
      %v226 = vadd.f32 0.0, %v225
      %v227 = vpop.f32.mrb[0].mxu0
      %v228 = vpop.f32.mrb[0].mxu0
      %v229 = vpop.f32.mrb[0].mxu0
      %230 = vdwg.mxu0
      %v232 = vsel %vm183, %v168, 0
      %v235 = vsel %vm187, %v176, 0
      %237 = vmatprep.subr.bf16.mxu0 0
      %238 = vmatpush1.bf16.msra.mxu0 %v235
      %239 = vmatprep.subr.bf16.mxu0 0
      %240 = vmatpush1.bf16.msra.mxu0 0
      %241 = vmatprep.subr.bf16.mxu0 0
      %242 = vmatpush1.bf16.msra.mxu0 0
      %243 = vmatprep.subr.bf16.mxu0 0
      %244 = vmatpush1.bf16.msra.mxu0 0
      %245 = vmatprep.subr.bf16.mxu0 0
      %246 = vmatpush1.bf16.msra.mxu0 0
      %247 = vmatprep.subr.bf16.mxu0 0
      %248 = vmatpush1.bf16.msra.mxu0 0
      %249 = vmatprep.subr.bf16.mxu0 0
      %250 = vmatpush1.bf16.msra.mxu0 0
      %251 = vmatprep.subr.bf16.mxu0 0
      %252 = vmatpush1.bf16.msra.mxu0 0
      %253 = vmatprep.subr.bf16.mxu0 0
      %254 = vmatpush1.bf16.msra.mxu0 0
      %255 = vmatprep.subr.bf16.mxu0 0
      %256 = vmatpush1.bf16.msra.mxu0 0
      %257 = vmatprep.subr.bf16.mxu0 0
      %258 = vmatpush1.bf16.msra.mxu0 0
      %259 = vmatprep.subr.bf16.mxu0 0
      %260 = vmatpush1.bf16.msra.mxu0 0
      %261 = vmatprep.subr.bf16.mxu0 0
      %262 = vmatpush1.bf16.msra.mxu0 0
      %263 = vmatprep.subr.bf16.mxu0 0
      %264 = vmatpush1.bf16.msra.mxu0 0
      %265 = vmatprep.subr.bf16.mxu0 0
      %266 = vmatpush1.bf16.msra.mxu0 0
      %267 = vmatprep.subr.bf16.mxu0 0
      %268 = vmatpush1.bf16.msra.mxu0 0
      %269 = vmatprep.mubr.bf16.mxu0 0
      %270 = vmatmul.mubr.bf16.gmra.mrb[0].mxu0 %v232
      %v271 = vpop.f32.mrb[0].mxu0
      %v272 = vadd.f32 0.0, %v271
      %v273 = vpop.f32.mrb[0].mxu0
      %v274 = vpop.f32.mrb[0].mxu0
      %v275 = vpop.f32.mrb[0].mxu0
      %276 = vdwg.mxu0
      %v278 = vsel %vm183, %v169, 0
      %v281 = vsel %vm187, %v177, 0
      %283 = vmatprep.subr.bf16.mxu0 0
      %284 = vmatpush1.bf16.msra.mxu0 %v281
      %285 = vmatprep.subr.bf16.mxu0 0
      %286 = vmatpush1.bf16.msra.mxu0 0
      %287 = vmatprep.subr.bf16.mxu0 0
      %288 = vmatpush1.bf16.msra.mxu0 0
      %289 = vmatprep.subr.bf16.mxu0 0
      %290 = vmatpush1.bf16.msra.mxu0 0
      %291 = vmatprep.subr.bf16.mxu0 0
      %292 = vmatpush1.bf16.msra.mxu0 0
      %293 = vmatprep.subr.bf16.mxu0 0
      %294 = vmatpush1.bf16.msra.mxu0 0
      %295 = vmatprep.subr.bf16.mxu0 0
      %296 = vmatpush1.bf16.msra.mxu0 0
      %297 = vmatprep.subr.bf16.mxu0 0
      %298 = vmatpush1.bf16.msra.mxu0 0
      %299 = vmatprep.subr.bf16.mxu0 0
      %300 = vmatpush1.bf16.msra.mxu0 0
      %301 = vmatprep.subr.bf16.mxu0 0
      %302 = vmatpush1.bf16.msra.mxu0 0
      %303 = vmatprep.subr.bf16.mxu0 0
      %304 = vmatpush1.bf16.msra.mxu0 0
      %305 = vmatprep.subr.bf16.mxu0 0
      %306 = vmatpush1.bf16.msra.mxu0 0
      %307 = vmatprep.subr.bf16.mxu0 0
      %308 = vmatpush1.bf16.msra.mxu0 0
      %309 = vmatprep.subr.bf16.mxu0 0
      %310 = vmatpush1.bf16.msra.mxu0 0
      %311 = vmatprep.subr.bf16.mxu0 0
      %312 = vmatpush1.bf16.msra.mxu0 0
      %313 = vmatprep.subr.bf16.mxu0 0
      %314 = vmatpush1.bf16.msra.mxu0 0
      %315 = vmatprep.mubr.bf16.mxu0 0
      %316 = vmatmul.mubr.bf16.gmra.mrb[0].mxu0 %v278
      %v317 = vpop.f32.mrb[0].mxu0
      %v318 = vadd.f32 0.0, %v317
      %v319 = vpop.f32.mrb[0].mxu0
      %v320 = vpop.f32.mrb[0].mxu0
      %v321 = vpop.f32.mrb[0].mxu0
      %322 = vdwg.mxu0
      %v324 = vsel %vm183, %v170, 0
      %v327 = vsel %vm187, %v178, 0
      %329 = vmatprep.subr.bf16.mxu0 0
      %330 = vmatpush1.bf16.msra.mxu0 %v327
      %331 = vmatprep.subr.bf16.mxu0 0
      %332 = vmatpush1.bf16.msra.mxu0 0
      %333 = vmatprep.subr.bf16.mxu0 0
      %334 = vmatpush1.bf16.msra.mxu0 0
      %335 = vmatprep.subr.bf16.mxu0 0
      %336 = vmatpush1.bf16.msra.mxu0 0
      %337 = vmatprep.subr.bf16.mxu0 0
      %338 = vmatpush1.bf16.msra.mxu0 0
      %339 = vmatprep.subr.bf16.mxu0 0
      %340 = vmatpush1.bf16.msra.mxu0 0
      %341 = vmatprep.subr.bf16.mxu0 0
      %342 = vmatpush1.bf16.msra.mxu0 0
      %343 = vmatprep.subr.bf16.mxu0 0
      %344 = vmatpush1.bf16.msra.mxu0 0
      %345 = vmatprep.subr.bf16.mxu0 0
      %346 = vmatpush1.bf16.msra.mxu0 0
      %347 = vmatprep.subr.bf16.mxu0 0
      %348 = vmatpush1.bf16.msra.mxu0 0
      %349 = vmatprep.subr.bf16.mxu0 0
      %350 = vmatpush1.bf16.msra.mxu0 0
      %351 = vmatprep.subr.bf16.mxu0 0
      %352 = vmatpush1.bf16.msra.mxu0 0
      %353 = vmatprep.subr.bf16.mxu0 0
      %354 = vmatpush1.bf16.msra.mxu0 0
      %355 = vmatprep.subr.bf16.mxu0 0
      %356 = vmatpush1.bf16.msra.mxu0 0
      %357 = vmatprep.subr.bf16.mxu0 0
      %358 = vmatpush1.bf16.msra.mxu0 0
      %359 = vmatprep.subr.bf16.mxu0 0
      %360 = vmatpush1.bf16.msra.mxu0 0
      %361 = vmatprep.mubr.bf16.mxu0 0
      %362 = vmatmul.mubr.bf16.gmra.mrb[0].mxu0 %v324
      %v363 = vpop.f32.mrb[0].mxu0
      %v364 = vadd.f32 0.0, %v363
      %v365 = vpop.f32.mrb[0].mxu0
      %v366 = vpop.f32.mrb[0].mxu0
      %v367 = vpop.f32.mrb[0].mxu0
      %368 = vdwg.mxu0
      %v370 = vsel %vm183, %v171, 0
      %v373 = vsel %vm187, %v179, 0
      %375 = vmatprep.subr.bf16.mxu0 0
      %376 = vmatpush1.bf16.msra.mxu0 %v373
      %377 = vmatprep.subr.bf16.mxu0 0
      %378 = vmatpush1.bf16.msra.mxu0 0
      %379 = vmatprep.subr.bf16.mxu0 0
      %380 = vmatpush1.bf16.msra.mxu0 0
      %381 = vmatprep.subr.bf16.mxu0 0
      %382 = vmatpush1.bf16.msra.mxu0 0
      %383 = vmatprep.subr.bf16.mxu0 0
      %384 = vmatpush1.bf16.msra.mxu0 0
      %385 = vmatprep.subr.bf16.mxu0 0
      %386 = vmatpush1.bf16.msra.mxu0 0
      %387 = vmatprep.subr.bf16.mxu0 0
      %388 = vmatpush1.bf16.msra.mxu0 0
      %389 = vmatprep.subr.bf16.mxu0 0
      %390 = vmatpush1.bf16.msra.mxu0 0
      %391 = vmatprep.subr.bf16.mxu0 0
      %392 = vmatpush1.bf16.msra.mxu0 0
      %393 = vmatprep.subr.bf16.mxu0 0
      %394 = vmatpush1.bf16.msra.mxu0 0
      %395 = vmatprep.subr.bf16.mxu0 0
      %396 = vmatpush1.bf16.msra.mxu0 0
      %397 = vmatprep.subr.bf16.mxu0 0
      %398 = vmatpush1.bf16.msra.mxu0 0
      %399 = vmatprep.subr.bf16.mxu0 0
      %400 = vmatpush1.bf16.msra.mxu0 0
      %401 = vmatprep.subr.bf16.mxu0 0
      %402 = vmatpush1.bf16.msra.mxu0 0
      %403 = vmatprep.subr.bf16.mxu0 0
      %404 = vmatpush1.bf16.msra.mxu0 0
      %405 = vmatprep.subr.bf16.mxu0 0
      %406 = vmatpush1.bf16.msra.mxu0 0
      %407 = vmatprep.mubr.bf16.mxu0 0
      %408 = vmatmul.mubr.bf16.gmra.mrb[0].mxu0 %v370
      %v409 = vpop.f32.mrb[0].mxu0
      %v410 = vadd.f32 0.0, %v409
      %v411 = vpop.f32.mrb[0].mxu0
      %v412 = vpop.f32.mrb[0].mxu0
      %v413 = vpop.f32.mrb[0].mxu0
      %414 = vdwg.mxu0
      %v416 = vsel %vm183, %v172, 0
      %v419 = vsel %vm187, %v180, 0
      %421 = vmatprep.subr.bf16.mxu0 0
      %422 = vmatpush1.bf16.msra.mxu0 %v419
      %423 = vmatprep.subr.bf16.mxu0 0
      %424 = vmatpush1.bf16.msra.mxu0 0
      %425 = vmatprep.subr.bf16.mxu0 0
      %426 = vmatpush1.bf16.msra.mxu0 0
      %427 = vmatprep.subr.bf16.mxu0 0
      %428 = vmatpush1.bf16.msra.mxu0 0
      %429 = vmatprep.subr.bf16.mxu0 0
      %430 = vmatpush1.bf16.msra.mxu0 0
      %431 = vmatprep.subr.bf16.mxu0 0
      %432 = vmatpush1.bf16.msra.mxu0 0
      %433 = vmatprep.subr.bf16.mxu0 0
      %434 = vmatpush1.bf16.msra.mxu0 0
      %435 = vmatprep.subr.bf16.mxu0 0
      %436 = vmatpush1.bf16.msra.mxu0 0
      %437 = vmatprep.subr.bf16.mxu0 0
      %438 = vmatpush1.bf16.msra.mxu0 0
      %439 = vmatprep.subr.bf16.mxu0 0
      %440 = vmatpush1.bf16.msra.mxu0 0
      %441 = vmatprep.subr.bf16.mxu0 0
      %442 = vmatpush1.bf16.msra.mxu0 0
      %443 = vmatprep.subr.bf16.mxu0 0
      %444 = vmatpush1.bf16.msra.mxu0 0
      %445 = vmatprep.subr.bf16.mxu0 0
      %446 = vmatpush1.bf16.msra.mxu0 0
      %447 = vmatprep.subr.bf16.mxu0 0
      %448 = vmatpush1.bf16.msra.mxu0 0
      %449 = vmatprep.subr.bf16.mxu0 0
      %450 = vmatpush1.bf16.msra.mxu0 0
      %451 = vmatprep.subr.bf16.mxu0 0
      %452 = vmatpush1.bf16.msra.mxu0 0
      %453 = vmatprep.mubr.bf16.mxu0 0
      %454 = vmatmul.mubr.bf16.gmra.mrb[0].mxu0 %v416
      %v455 = vpop.f32.mrb[0].mxu0
      %v456 = vadd.f32 0.0, %v455
      %v457 = vpop.f32.mrb[0].mxu0
      %v458 = vpop.f32.mrb[0].mxu0
      %v459 = vpop.f32.mrb[0].mxu0
      %460 = vdwg.mxu0
      %v462 = vsel %vm183, %v173, 0
      %v465 = vsel %vm187, %v181, 0
      %467 = vmatprep.subr.bf16.mxu0 0
      %468 = vmatpush1.bf16.msra.mxu0 %v465
      %469 = vmatprep.subr.bf16.mxu0 0
      %470 = vmatpush1.bf16.msra.mxu0 0
      %471 = vmatprep.subr.bf16.mxu0 0
      %472 = vmatpush1.bf16.msra.mxu0 0
      %473 = vmatprep.subr.bf16.mxu0 0
      %474 = vmatpush1.bf16.msra.mxu0 0
      %475 = vmatprep.subr.bf16.mxu0 0
      %476 = vmatpush1.bf16.msra.mxu0 0
      %477 = vmatprep.subr.bf16.mxu0 0
      %478 = vmatpush1.bf16.msra.mxu0 0
      %479 = vmatprep.subr.bf16.mxu0 0
      %480 = vmatpush1.bf16.msra.mxu0 0
      %481 = vmatprep.subr.bf16.mxu0 0
      %482 = vmatpush1.bf16.msra.mxu0 0
      %483 = vmatprep.subr.bf16.mxu0 0
      %484 = vmatpush1.bf16.msra.mxu0 0
      %485 = vmatprep.subr.bf16.mxu0 0
      %486 = vmatpush1.bf16.msra.mxu0 0
      %487 = vmatprep.subr.bf16.mxu0 0
      %488 = vmatpush1.bf16.msra.mxu0 0
      %489 = vmatprep.subr.bf16.mxu0 0
      %490 = vmatpush1.bf16.msra.mxu0 0
      %491 = vmatprep.subr.bf16.mxu0 0
      %492 = vmatpush1.bf16.msra.mxu0 0
      %493 = vmatprep.subr.bf16.mxu0 0
      %494 = vmatpush1.bf16.msra.mxu0 0
      %495 = vmatprep.subr.bf16.mxu0 0
      %496 = vmatpush1.bf16.msra.mxu0 0
      %497 = vmatprep.subr.bf16.mxu0 0
      %498 = vmatpush1.bf16.msra.mxu0 0
      %499 = vmatprep.mubr.bf16.mxu0 0
      %500 = vmatmul.mubr.bf16.gmra.mrb[0].mxu0 %v462
      %v501 = vpop.f32.mrb[0].mxu0
      %v502 = vadd.f32 0.0, %v501
      %v503 = vpop.f32.mrb[0].mxu0
      %v504 = vpop.f32.mrb[0].mxu0
      %v505 = vpop.f32.mrb[0].mxu0
      %506 = vdwg.mxu0
      %v508 = vsel %vm183, %v174, 0
      %v511 = vsel %vm187, %v182, 0
      %513 = vmatprep.subr.bf16.mxu0 0
      %514 = vmatpush1.bf16.msra.mxu0 %v511
      %515 = vmatprep.subr.bf16.mxu0 0
      %516 = vmatpush1.bf16.msra.mxu0 0
      %517 = vmatprep.subr.bf16.mxu0 0
      %518 = vmatpush1.bf16.msra.mxu0 0
      %519 = vmatprep.subr.bf16.mxu0 0
      %520 = vmatpush1.bf16.msra.mxu0 0
      %521 = vmatprep.subr.bf16.mxu0 0
      %522 = vmatpush1.bf16.msra.mxu0 0
      %523 = vmatprep.subr.bf16.mxu0 0
      %524 = vmatpush1.bf16.msra.mxu0 0
      %525 = vmatprep.subr.bf16.mxu0 0
      %526 = vmatpush1.bf16.msra.mxu0 0
      %527 = vmatprep.subr.bf16.mxu0 0
      %528 = vmatpush1.bf16.msra.mxu0 0
      %529 = vmatprep.subr.bf16.mxu0 0
      %530 = vmatpush1.bf16.msra.mxu0 0
      %531 = vmatprep.subr.bf16.mxu0 0
      %532 = vmatpush1.bf16.msra.mxu0 0
      %533 = vmatprep.subr.bf16.mxu0 0
      %534 = vmatpush1.bf16.msra.mxu0 0
      %535 = vmatprep.subr.bf16.mxu0 0
      %536 = vmatpush1.bf16.msra.mxu0 0
      %537 = vmatprep.subr.bf16.mxu0 0
      %538 = vmatpush1.bf16.msra.mxu0 0
      %539 = vmatprep.subr.bf16.mxu0 0
      %540 = vmatpush1.bf16.msra.mxu0 0
      %541 = vmatprep.subr.bf16.mxu0 0
      %542 = vmatpush1.bf16.msra.mxu0 0
      %543 = vmatprep.subr.bf16.mxu0 0
      %544 = vmatpush1.bf16.msra.mxu0 0
      %545 = vmatprep.mubr.bf16.mxu0 0
      %546 = vmatmul.mubr.bf16.gmra.mrb[0].mxu0 %v508
      %v547 = vpop.f32.mrb[0].mxu0
      %v548 = vadd.f32 0.0, %v547
      %v549 = vpop.f32.mrb[0].mxu0
      %v550 = vpop.f32.mrb[0].mxu0
      %v551 = vpop.f32.mrb[0].mxu0
      %552 = vdwg.mxu0
      %vm553 = vcmask 58368
      %554 = vst.msk [vmem:[%s164] sm:$0x3] %vm553, %v226
      %555 = vst.msk [vmem:[%s164 + $0x2] sm:$0x3] %vm553, %v272
      %556 = vst.msk [vmem:[%s164 + $0x4] sm:$0x3] %vm553, %v318
      %557 = vst.msk [vmem:[%s164 + $0x6] sm:$0x3] %vm553, %v364
      %558 = vst.msk [vmem:[%s164 + $0x8] sm:$0x3] %vm553, %v410
      %559 = vst.msk [vmem:[%s164 + $0xa] sm:$0x3] %vm553, %v456
      %560 = vst.msk [vmem:[%s164 + $0xc] sm:$0x3] %vm553, %v502
      %561 = vst.msk [vmem:[%s164 + $0xe] sm:$0x3] %vm553, %v548
      %s562 = smul.u32 8, %s13
      %p563 = scmp.lt.s32.totalorder %s562, 31
      %s564 = scalar_select %p563, %s562, 31
      %s565 = smul.addr %s564, 2
      %s566 = scalar_lea.vmem %s2, %s565
      // Predicated region
      $region29: #{tpu_custom_call.1} parent=27 // pred_check
        %p567 = pneg %p83
      $region30: #{tpu_custom_call.1} parent=27 // pred_check_branch
        %569 = sbr.rel (%p567) target = $region32
      $region31: #{tpu_custom_call.1} parent=27 // pred_region
        %s570 = smul.u32 8, %s13
      $region32: #{tpu_custom_call.1} parent=27 // pred_fallthru
        _
    $region28: #{tpu_custom_call.1} parent=5 // pred_fallthru
      _
    %p571 = scmp.le.s32.totalorder 2, %s8
    // Predicated region
    $region33: #{tpu_custom_call.1} parent=5 // pred_check
      %p572 = pneg %p571
    $region34: #{tpu_custom_call.1} parent=5 // pred_check_branch
      %574 = sbr.rel (%p572) target = $region36
    $region35: #{tpu_custom_call.1} parent=5 // pred_region
      %s575 = ssub.s32 %s8, 2
      // Predicated region
      $region37: #{tpu_custom_call.1} parent=35 // pred_check
        %p576 = pneg %p89
      $region38: #{tpu_custom_call.1} parent=35 // pred_check_branch
        %578 = sbr.rel (%p576) target = $region40
      $region39: #{tpu_custom_call.1} parent=35 // pred_region
        %s579 = smul.u32 8, %s14
        %p580 = scmp.lt.s32.totalorder %s579, 31
        %s581 = scalar_select %p580, %s579, 31
        %s582 = smul.addr %s581, 2
        %s583 = scalar_lea.vmem %s2, %s582
      $region40: #{tpu_custom_call.1} parent=35 // pred_fallthru
        _
    $region36: #{tpu_custom_call.1} parent=5 // pred_fallthru
      _
  $region6: #{tpu_custom_call.1} parent=0 // loop_footer
    %s12 = sadd.s32 1, %s8
  $region7: #{tpu_custom_call.1} parent=0 // loop_footer_branch
    %7 = sbr.rel target = $region3
  $region8: #{tpu_custom_call.1} parent=0 // loop_exit
    _

</llo_original>
